<compile_context>
chip_gen: v7x
topology: tpu7x:2x2x1
jax: 0.10.0
libtpu: 0.0.40
codegen_flags: <defaults>
</compile_context>

<pallas_src>
import numpy as np
import jax
import jax.numpy as jnp
from jax.experimental import pallas as pl
from jax.experimental.pallas import tpu as pltpu


# --------------------------------------------------------------------------- #
# Kernel factory (n modalities is a static Python int)
# --------------------------------------------------------------------------- #
def _make_kernel(n):
    def kernel(*refs):
        # refs: x_0..x_{n-1} [TB, d_i], w_0..w_{n-1} [d_i, R], bias [1, R], out [TB, R]
        x_refs = refs[:n]
        w_refs = refs[n:2 * n]
        b_ref = refs[2 * n]
        o_ref = refs[2 * n + 1]

        acc = jnp.dot(x_refs[0][...], w_refs[0][...],
                      preferred_element_type=jnp.float32)
        for i in range(1, n):
            acc = acc + jnp.dot(x_refs[i][...], w_refs[i][...],
                                preferred_element_type=jnp.float32)
        o_ref[...] = (acc + b_ref[...]).astype(o_ref.dtype)
    return kernel


# --------------------------------------------------------------------------- #
# Batch-tile selection
# --------------------------------------------------------------------------- #
def _round_up(x, m):
    return ((x + m - 1) // m) * m


def _choose_tb(B, *, max_tb=2048, target_steps=4):
    """Pick a batch tile: big enough to amortize per-step overhead, but keep a
    few grid steps when batch is large so both v7x TensorCores get work."""
    Bp = _round_up(B, 8)
    if Bp <= 256:
        return Bp                                    # single small block
    tb = _round_up(-(-Bp // target_steps), 256)      # multiple of 256 (v6e/v7x MXU N)
    return min(tb, max_tb, _round_up(Bp, 256))


# --------------------------------------------------------------------------- #
# Wrapper
# --------------------------------------------------------------------------- #
def sig_weighted_fusion(outs, kparams, *, max_block_b=2048):
    """outs: list of n arrays [B, d_i] (d_i = 2*input_size_all[i]).
    Returns (op, list of n [B]) matching the torch module's forward."""
    n = len(outs)
    B = outs[0].shape[0]
    sizes = [int(o.shape[1]) for o in outs]
    out_size = kparams['out_size']
    R = out_size + n

    TB = _choose_tb(B, max_tb=max_block_b)
    grid = (pl.cdiv(B, TB),)

    batch_map = lambda i: (i, 0)
    const_map = lambda i: (0, 0)

    in_specs = (
        [pl.BlockSpec((TB, sizes[m]), batch_map) for m in range(n)]       # x_i (blocked over batch)
        + [pl.BlockSpec((sizes[m], R), const_map) for m in range(n)]      # fused weights (resident)
        + [pl.BlockSpec((1, R), const_map)]                               # fused bias (resident)
    )

    y = pl.pallas_call(
        _make_kernel(n),
        grid=grid,
        in_specs=in_specs,
        out_specs=pl.BlockSpec((TB, R), batch_map),
        out_shape=jax.ShapeDtypeStruct((B, R), jnp.float32),
        compiler_params=pltpu.CompilerParams(
            dimension_semantics=("parallel",),
            vmem_limit_bytes=32 * 1024 * 1024,
        ),
    )(*outs, *kparams['ws'], kparams['bias'])

    op = y[:, 0] if out_size == 1 else y[:, :out_size]   # matches torch .squeeze(-1)
    Outs = [y[:, out_size + i] for i in range(n)]
    return op, Outs


# --------------------------------------------------------------------------- #
# Parameters (torch-layout) and kernel-layout packing
# --------------------------------------------------------------------------- #
def make_params(key, input_size_all, out_size=1, bidirectional=True):
    mult = 2 if bidirectional else 1
    n = len(input_size_all)
    sizes = [mult * s for s in input_size_all]
    D = sum(sizes)
    ks = jax.random.split(key, 2 * n + 3)
    s = 0.2
    return {
        'sizes': sizes,
        # nn.Parameter(torch.zeros(n)) in the module; random here for a meaningful test
        'w':  s * jax.random.normal(ks[0], (n,), jnp.float32),
        'wf': s * jax.random.normal(ks[1], (out_size, D), jnp.float32),   # Linear.weight [out, in]
        'bf': s * jax.random.normal(ks[2], (out_size,), jnp.float32),
        'wc': [s * jax.random.normal(ks[3 + i], (1, sizes[i]), jnp.float32) for i in range(n)],
        'bc': [s * jax.random.normal(ks[3 + n + i], (1,), jnp.float32) for i in range(n)],
    }


def pack_kernel_params(p):
    """Fold the eval-mode sigmoid gate into foreLinear and fuse foreLinear +
    CompOuts into one [d_i, out_size+n] weight slab per modality.
    NOTE: must be re-run whenever p['w'] changes (eval-mode assumption)."""
    sizes = p['sizes']
    n = len(sizes)
    out_size = int(p['wf'].shape[0])
    R = out_size + n

    gate = np.asarray(jax.nn.sigmoid(10.0 * p['w']))          # [n], constant in eval mode
    wf = np.asarray(p['wf'])                                   # [out_size, D]

    ws = []
    off = 0
    for i, sz in enumerate(sizes):
        wi = np.zeros((sz, R), np.float32)
        # gated foreLinear columns for this modality: (gate[i]*x_i) @ Wf_i^T == x_i @ (gate[i]*Wf_i^T)
        wi[:, :out_size] = wf[:, off:off + sz].T * gate[i]
        # this modality's CompOuts row (block-diagonal across modalities)
        wi[:, out_size + i] = np.asarray(p['wc'][i][0])
        ws.append(jnp.asarray(wi))
        off += sz

    bias = np.zeros((1, R), np.float32)
    bias[0, :out_size] = np.asarray(p['bf'])
    bias[0, out_size:] = np.asarray([float(np.asarray(p['bc'][i])[0]) for i in range(n)])

    return {'ws': ws, 'bias': jnp.asarray(bias), 'out_size': out_size, 'n': n}


# --------------------------------------------------------------------------- #
# Pure-JAX reference (torch semantics)
# --------------------------------------------------------------------------- #
def reference_fusion(outs, p):
    n = len(outs)
    w = jax.nn.sigmoid(p['w'] * 10.0)
    cont = jnp.concatenate([w[i] * outs[i] for i in range(n)], axis=-1)
    op = (cont @ p['wf'].T + p['bf']).squeeze(-1)
    Outs = [(outs[i] @ p['wc'][i].T + p['bc'][i]).squeeze(-1) for i in range(n)]
    return op, Outs


# --------------------------------------------------------------------------- #
if __name__ == "__main__":
    key = jax.random.PRNGKey(0)
    input_size_all = [16, 8, 12]          # 3 modalities, bidirectional -> feature dims 32, 16, 24
    out_size = 1

    pkey, xkey = jax.random.split(key)
    params = make_params(pkey, input_size_all, out_size)
    kparams = pack_kernel_params(params)

    def run_and_check(B, xk):
        xkeys = jax.random.split(xk, len(input_size_all))
        outs = [jax.random.normal(k, (B, 2 * s), jnp.float32)
                for k, s in zip(xkeys, input_size_all)]
        op, Outs = sig_weighted_fusion(outs, kparams)
        op = jax.block_until_ready(op)
        Outs = [jax.block_until_ready(o) for o in Outs]
        op_ref, Outs_ref = reference_fusion(outs, params)
        assert op.shape == op_ref.shape
        assert jnp.allclose(op, op_ref, rtol=1e-4, atol=1e-5), "op mismatch"
        for a, b in zip(Outs, Outs_ref):
            assert a.shape == b.shape
            assert jnp.allclose(a, b, rtol=1e-4, atol=1e-5), "comp-out mismatch"

    k1, k2 = jax.random.split(xkey)
    run_and_check(B=5, xk=k1)      # tiny batch: single partial block (TB=8, grid=1)
    run_and_check(B=300, xk=k2)    # larger batch: TB=256, grid=2 (exercises multi-step grid)

    print("KERNEL_OK")
</pallas_src>

<mosaic_0001>
module attributes {stable_mosaic.version = 11 : i64} {
  func.func @kernel(%arg0: i32, %arg1: memref<8x32xf32, #tpu.memory_space<vmem>>, %arg2: memref<8x16xf32, #tpu.memory_space<vmem>>, %arg3: memref<8x24xf32, #tpu.memory_space<vmem>>, %arg4: memref<32x4xf32, #tpu.memory_space<vmem>>, %arg5: memref<16x4xf32, #tpu.memory_space<vmem>>, %arg6: memref<24x4xf32, #tpu.memory_space<vmem>>, %arg7: memref<1x4xf32, #tpu.memory_space<vmem>>, %arg8: memref<8x4xf32, #tpu.memory_space<vmem>>) attributes {dimension_semantics = [#tpu.dimension_semantics<parallel>], iteration_bounds = array<i64: 1>, scalar_prefetch = 0 : i64, scratch_operands = 0 : i64, tpu.core_type = #tpu.core_type<tc>, window_params = [{transform_indices = @transform_0, window_bounds = array<i64: 8, 32>}, {transform_indices = @transform_1, window_bounds = array<i64: 8, 16>}, {transform_indices = @transform_2, window_bounds = array<i64: 8, 24>}, {pipeline_mode = #tpu.pipeline_mode<synchronous>, transform_indices = @transform_3, window_bounds = array<i64: 32, 4>}, {pipeline_mode = #tpu.pipeline_mode<synchronous>, transform_indices = @transform_4, window_bounds = array<i64: 16, 4>}, {pipeline_mode = #tpu.pipeline_mode<synchronous>, transform_indices = @transform_5, window_bounds = array<i64: 24, 4>}, {pipeline_mode = #tpu.pipeline_mode<synchronous>, transform_indices = @transform_6, window_bounds = array<i64: 1, 4>}, {transform_indices = @transform_7, window_bounds = array<i64: 8, 4>}]} {
    %c0 = arith.constant 0 : index
    %c0_0 = arith.constant 0 : index
    %0 = vector.load %arg1[%c0, %c0_0] : memref<8x32xf32, #tpu.memory_space<vmem>>, vector<8x32xf32>
    %c0_1 = arith.constant 0 : index
    %c0_2 = arith.constant 0 : index
    %1 = vector.load %arg4[%c0_1, %c0_2] : memref<32x4xf32, #tpu.memory_space<vmem>>, vector<32x4xf32>
    %cst = arith.constant dense<0.000000e+00> : vector<8x4xf32>
    %2 = tpu.matmul %0, %1, %cst {dimension_numbers = #tpu.dot_dimension_numbers<[1], [0], [0], [1], [0, 0, 1, 1], [], []>} : vector<8x32xf32>, vector<32x4xf32>, vector<8x4xf32> -> vector<8x4xf32>
    %c0_3 = arith.constant 0 : index
    %c0_4 = arith.constant 0 : index
    %3 = vector.load %arg2[%c0_3, %c0_4] : memref<8x16xf32, #tpu.memory_space<vmem>>, vector<8x16xf32>
    %c0_5 = arith.constant 0 : index
    %c0_6 = arith.constant 0 : index
    %4 = vector.load %arg5[%c0_5, %c0_6] : memref<16x4xf32, #tpu.memory_space<vmem>>, vector<16x4xf32>
    %cst_7 = arith.constant dense<0.000000e+00> : vector<8x4xf32>
    %5 = tpu.matmul %3, %4, %cst_7 {dimension_numbers = #tpu.dot_dimension_numbers<[1], [0], [0], [1], [0, 0, 1, 1], [], []>} : vector<8x16xf32>, vector<16x4xf32>, vector<8x4xf32> -> vector<8x4xf32>
    %6 = arith.addf %2, %5 : vector<8x4xf32>
    %c0_8 = arith.constant 0 : index
    %c0_9 = arith.constant 0 : index
    %7 = vector.load %arg3[%c0_8, %c0_9] : memref<8x24xf32, #tpu.memory_space<vmem>>, vector<8x24xf32>
    %c0_10 = arith.constant 0 : index
    %c0_11 = arith.constant 0 : index
    %8 = vector.load %arg6[%c0_10, %c0_11] : memref<24x4xf32, #tpu.memory_space<vmem>>, vector<24x4xf32>
    %cst_12 = arith.constant dense<0.000000e+00> : vector<8x4xf32>
    %9 = tpu.matmul %7, %8, %cst_12 {dimension_numbers = #tpu.dot_dimension_numbers<[1], [0], [0], [1], [0, 0, 1, 1], [], []>} : vector<8x24xf32>, vector<24x4xf32>, vector<8x4xf32> -> vector<8x4xf32>
    %10 = arith.addf %6, %9 : vector<8x4xf32>
    %c0_13 = arith.constant 0 : index
    %c0_14 = arith.constant 0 : index
    %11 = vector.load %arg7[%c0_13, %c0_14] : memref<1x4xf32, #tpu.memory_space<vmem>>, vector<1x4xf32>
    %12 = vector.broadcast %11 : vector<1x4xf32> to vector<8x4xf32>
    %13 = arith.addf %10, %12 : vector<8x4xf32>
    %c0_15 = arith.constant 0 : index
    %c0_16 = arith.constant 0 : index
    %14 = vector.load %arg8[%c0_15, %c0_16] : memref<8x4xf32, #tpu.memory_space<vmem>>, vector<8x4xf32>
    tpu.vector_store %arg8[%c0_15, %c0_16], %13 {strides = array<i32>} : memref<8x4xf32, #tpu.memory_space<vmem>>, vector<8x4xf32>,
    return
  }
  func.func @transform_0(%arg0: i32) -> (i32, i32) {
    %c0_i32 = arith.constant 0 : i32
    %c0_i32_0 = arith.constant 0 : i32
    return %arg0, %c0_i32 : i32, i32
  }
  func.func @transform_1(%arg0: i32) -> (i32, i32) {
    %c0_i32 = arith.constant 0 : i32
    %c0_i32_0 = arith.constant 0 : i32
    return %arg0, %c0_i32 : i32, i32
  }
  func.func @transform_2(%arg0: i32) -> (i32, i32) {
    %c0_i32 = arith.constant 0 : i32
    %c0_i32_0 = arith.constant 0 : i32
    return %arg0, %c0_i32 : i32, i32
  }
  func.func @transform_3(%arg0: i32) -> (i32, i32) {
    %c0_i32 = arith.constant 0 : i32
    %c0_i32_0 = arith.constant 0 : i32
    %c0_i32_1 = arith.constant 0 : i32
    return %c0_i32, %c0_i32_0 : i32, i32
  }
  func.func @transform_4(%arg0: i32) -> (i32, i32) {
    %c0_i32 = arith.constant 0 : i32
    %c0_i32_0 = arith.constant 0 : i32
    %c0_i32_1 = arith.constant 0 : i32
    return %c0_i32, %c0_i32_0 : i32, i32
  }
  func.func @transform_5(%arg0: i32) -> (i32, i32) {
    %c0_i32 = arith.constant 0 : i32
    %c0_i32_0 = arith.constant 0 : i32
    %c0_i32_1 = arith.constant 0 : i32
    return %c0_i32, %c0_i32_0 : i32, i32
  }
  func.func @transform_6(%arg0: i32) -> (i32, i32) {
    %c0_i32 = arith.constant 0 : i32
    %c0_i32_0 = arith.constant 0 : i32
    %c0_i32_1 = arith.constant 0 : i32
    return %c0_i32, %c0_i32_0 : i32, i32
  }
  func.func @transform_7(%arg0: i32) -> (i32, i32) {
    %c0_i32 = arith.constant 0 : i32
    %c0_i32_0 = arith.constant 0 : i32
    return %arg0, %c0_i32 : i32, i32
  }
}

</mosaic_0001>

<llo_original>
// kernel: tpu_custom_call.1
$region0: #{tpu_custom_call.1}
  #allocation0 [shape = 'u32[]', space=smem, size = 0x4, offset = 0x4, fixed_abs, tag = 'smem constant byte address 0x4 - core index']
  #allocation1 [shape = 'u32[144,128]{1,0:T(1,128)}', space=vmem, size = 0x12000, scoped, tag = 'internal scratch']
  %s0 = inlined_call_operand.vmem [shape: f32[5,32], index: 0, kind: input, shape index: {}]
  %s1 = inlined_call_operand.vmem [shape: f32[5,16], index: 1, kind: input, shape index: {}]
  %s2 = inlined_call_operand.vmem [shape: f32[5,24], index: 2, kind: input, shape index: {}]
  %s3 = inlined_call_operand.vmem [shape: f32[32,4], index: 3, kind: input, shape index: {}]
  %s4 = inlined_call_operand.vmem [shape: f32[16,4], index: 4, kind: input, shape index: {}]
  %s5 = inlined_call_operand.vmem [shape: f32[24,4], index: 5, kind: input, shape index: {}]
  %s6 = inlined_call_operand.vmem [shape: f32[1,4], index: 6, kind: input, shape index: {}]
  %s7 = inlined_call_operand.vmem [shape: f32[5,4], index: 7, kind: output, shape index: {}]
  %s8 = sld [smem:[#allocation0]]
  $region38: #{tpu_custom_call.1} parent=0
    _
  %s10 = ssub.s32 1, %s8
  %s11 = scalar_select 0, %s10, %s8
  // Predicated region
  $region2: #{tpu_custom_call.1} parent=0 // pred_check
    _
  $region3: #{tpu_custom_call.1} parent=0 // pred_check_branch
    %13 = sbr.rel (0) target = $region5
  $region4: #{tpu_custom_call.1} parent=0 // pred_region
    _
  $region5: #{tpu_custom_call.1} parent=0 // pred_fallthru
    _
  // Predicated region
  $region6: #{tpu_custom_call.1} parent=0 // pred_check
    _
  $region7: #{tpu_custom_call.1} parent=0 // pred_check_branch
    %15 = sbr.rel (0) target = $region9
  $region8: #{tpu_custom_call.1} parent=0 // pred_region
    _
  $region9: #{tpu_custom_call.1} parent=0 // pred_fallthru
    _
  // Predicated region
  $region10: #{tpu_custom_call.1} parent=0 // pred_check
    _
  $region11: #{tpu_custom_call.1} parent=0 // pred_check_branch
    %17 = sbr.rel (0) target = $region13
  $region12: #{tpu_custom_call.1} parent=0 // pred_region
    _
  $region13: #{tpu_custom_call.1} parent=0 // pred_fallthru
    _
  // Predicated region
  $region14: #{tpu_custom_call.1} parent=0 // pred_check
    _
  $region15: #{tpu_custom_call.1} parent=0 // pred_check_branch
    %19 = sbr.rel (0) target = $region17
  $region16: #{tpu_custom_call.1} parent=0 // pred_region
    _
  $region17: #{tpu_custom_call.1} parent=0 // pred_fallthru
    _
  // Predicated region
  $region18: #{tpu_custom_call.1} parent=0 // pred_check
    _
  $region19: #{tpu_custom_call.1} parent=0 // pred_check_branch
    %21 = sbr.rel (0) target = $region21
  $region20: #{tpu_custom_call.1} parent=0 // pred_region
    _
  $region21: #{tpu_custom_call.1} parent=0 // pred_fallthru
    _
  // Predicated region
  $region22: #{tpu_custom_call.1} parent=0 // pred_check
    _
  $region23: #{tpu_custom_call.1} parent=0 // pred_check_branch
    %23 = sbr.rel (0) target = $region25
  $region24: #{tpu_custom_call.1} parent=0 // pred_region
    _
  $region25: #{tpu_custom_call.1} parent=0 // pred_fallthru
    _
  // Predicated region
  $region26: #{tpu_custom_call.1} parent=0 // pred_check
    _
  $region27: #{tpu_custom_call.1} parent=0 // pred_check_branch
    %25 = sbr.rel (0) target = $region29
  $region28: #{tpu_custom_call.1} parent=0 // pred_region
    _
  $region29: #{tpu_custom_call.1} parent=0 // pred_fallthru
    _
  %v26 = vld [vmem:[%s0] sm:$0xff]
  %v27 = vld [vmem:[%s3] sm:$0xff]
  %v28 = vld [vmem:[%s3 + $0x8] sm:$0xff]
  %v29 = vld [vmem:[%s3 + $0x10] sm:$0xff]
  %v30 = vld [vmem:[%s3 + $0x18] sm:$0xff]
  %v31 = vld [vmem:[%s1] sm:$0xff]
  %v32 = vld [vmem:[%s4] sm:$0xff]
  %v33 = vld [vmem:[%s4 + $0x8] sm:$0xff]
  %vm34 = vcmask 130048
  %v36 = vsel %vm34, %v31, 0
  %38 = vmatprep.subr.mxu0 0.0
  %39 = vmatpush1.msra.mxu0 %v32
  %40 = vmatprep.subr.mxu0 0.0
  %41 = vmatpush1.msra.mxu0 %v33
  %42 = vmatprep.subr.mxu0 0.0
  %43 = vmatpush1.msra.mxu0 0.0
  %44 = vmatprep.subr.mxu0 0.0
  %45 = vmatpush1.msra.mxu0 0.0
  %46 = vmatprep.subr.mxu0 0.0
  %47 = vmatpush1.msra.mxu0 0.0
  %48 = vmatprep.subr.mxu0 0.0
  %49 = vmatpush1.msra.mxu0 0.0
  %50 = vmatprep.subr.mxu0 0.0
  %51 = vmatpush1.msra.mxu0 0.0
  %52 = vmatprep.subr.mxu0 0.0
  %53 = vmatpush1.msra.mxu0 0.0
  %54 = vmatprep.subr.mxu0 0.0
  %55 = vmatpush1.msra.mxu0 0.0
  %56 = vmatprep.subr.mxu0 0.0
  %57 = vmatpush1.msra.mxu0 0.0
  %58 = vmatprep.subr.mxu0 0.0
  %59 = vmatpush1.msra.mxu0 0.0
  %60 = vmatprep.subr.mxu0 0.0
  %61 = vmatpush1.msra.mxu0 0.0
  %62 = vmatprep.subr.mxu0 0.0
  %63 = vmatpush1.msra.mxu0 0.0
  %64 = vmatprep.subr.mxu0 0.0
  %65 = vmatpush1.msra.mxu0 0.0
  %66 = vmatprep.subr.mxu0 0.0
  %67 = vmatpush1.msra.mxu0 0.0
  %68 = vmatprep.subr.mxu0 0.0
  %69 = vmatpush1.msra.mxu0 0.0
  %70 = vmatprep.subr.mxu0 0.0
  %71 = vmatpush1.msra.mxu0 0.0
  %72 = vmatprep.subr.mxu0 0.0
  %73 = vmatpush1.msra.mxu0 0.0
  %74 = vmatprep.subr.mxu0 0.0
  %75 = vmatpush1.msra.mxu0 0.0
  %76 = vmatprep.subr.mxu0 0.0
  %77 = vmatpush1.msra.mxu0 0.0
  %78 = vmatprep.subr.mxu0 0.0
  %79 = vmatpush1.msra.mxu0 0.0
  %80 = vmatprep.subr.mxu0 0.0
  %81 = vmatpush1.msra.mxu0 0.0
  %82 = vmatprep.subr.mxu0 0.0
  %83 = vmatpush1.msra.mxu0 0.0
  %84 = vmatprep.subr.mxu0 0.0
  %85 = vmatpush1.msra.mxu0 0.0
  %86 = vmatprep.subr.mxu0 0.0
  %87 = vmatpush1.msra.mxu0 0.0
  %88 = vmatprep.subr.mxu0 0.0
  %89 = vmatpush1.msra.mxu0 0.0
  %90 = vmatprep.subr.mxu0 0.0
  %91 = vmatpush1.msra.mxu0 0.0
  %92 = vmatprep.subr.mxu0 0.0
  %93 = vmatpush1.msra.mxu0 0.0
  %94 = vmatprep.subr.mxu0 0.0
  %95 = vmatpush1.msra.mxu0 0.0
  %96 = vmatprep.subr.mxu0 0.0
  %97 = vmatpush1.msra.mxu0 0.0
  %98 = vmatprep.subr.mxu0 0.0
  %99 = vmatpush1.msra.mxu0 0.0
  %100 = vmatprep.subr.mxu0 0.0
  %101 = vmatpush1.msra.mxu0 0.0
  %102 = vmatprep.mubr.f32.mxu0 0.0
  %103 = vmatmul.mubr.f32.gmra.mrb[0].mxu0 %v36
  %v104 = vpop.f32.mrb[0].mxu0
  %v105 = vadd.f32 0.0, %v104
  %v106 = vpop.f32.mrb[0].mxu0
  %107 = vdwg.mxu0
  %vm108 = vcmask 261120
  %v110 = vsel %vm108, %v26, 0
  %112 = vmatprep.subr.mxu0 0.0
  %113 = vmatpush1.msra.mxu0 %v27
  %114 = vmatprep.subr.mxu0 0.0
  %115 = vmatpush1.msra.mxu0 %v28
  %116 = vmatprep.subr.mxu0 0.0
  %117 = vmatpush1.msra.mxu0 %v29
  %118 = vmatprep.subr.mxu0 0.0
  %119 = vmatpush1.msra.mxu0 %v30
  %120 = vmatprep.subr.mxu0 0.0
  %121 = vmatpush1.msra.mxu0 0.0
  %122 = vmatprep.subr.mxu0 0.0
  %123 = vmatpush1.msra.mxu0 0.0
  %124 = vmatprep.subr.mxu0 0.0
  %125 = vmatpush1.msra.mxu0 0.0
  %126 = vmatprep.subr.mxu0 0.0
  %127 = vmatpush1.msra.mxu0 0.0
  %128 = vmatprep.subr.mxu0 0.0
  %129 = vmatpush1.msra.mxu0 0.0
  %130 = vmatprep.subr.mxu0 0.0
  %131 = vmatpush1.msra.mxu0 0.0
  %132 = vmatprep.subr.mxu0 0.0
  %133 = vmatpush1.msra.mxu0 0.0
  %134 = vmatprep.subr.mxu0 0.0
  %135 = vmatpush1.msra.mxu0 0.0
  %136 = vmatprep.subr.mxu0 0.0
  %137 = vmatpush1.msra.mxu0 0.0
  %138 = vmatprep.subr.mxu0 0.0
  %139 = vmatpush1.msra.mxu0 0.0
  %140 = vmatprep.subr.mxu0 0.0
  %141 = vmatpush1.msra.mxu0 0.0
  %142 = vmatprep.subr.mxu0 0.0
  %143 = vmatpush1.msra.mxu0 0.0
  %144 = vmatprep.subr.mxu0 0.0
  %145 = vmatpush1.msra.mxu0 0.0
  %146 = vmatprep.subr.mxu0 0.0
  %147 = vmatpush1.msra.mxu0 0.0
  %148 = vmatprep.subr.mxu0 0.0
  %149 = vmatpush1.msra.mxu0 0.0
  %150 = vmatprep.subr.mxu0 0.0
  %151 = vmatpush1.msra.mxu0 0.0
  %152 = vmatprep.subr.mxu0 0.0
  %153 = vmatpush1.msra.mxu0 0.0
  %154 = vmatprep.subr.mxu0 0.0
  %155 = vmatpush1.msra.mxu0 0.0
  %156 = vmatprep.subr.mxu0 0.0
  %157 = vmatpush1.msra.mxu0 0.0
  %158 = vmatprep.subr.mxu0 0.0
  %159 = vmatpush1.msra.mxu0 0.0
  %160 = vmatprep.subr.mxu0 0.0
  %161 = vmatpush1.msra.mxu0 0.0
  %162 = vmatprep.subr.mxu0 0.0
  %163 = vmatpush1.msra.mxu0 0.0
  %164 = vmatprep.subr.mxu0 0.0
  %165 = vmatpush1.msra.mxu0 0.0
  %166 = vmatprep.subr.mxu0 0.0
  %167 = vmatpush1.msra.mxu0 0.0
  %168 = vmatprep.subr.mxu0 0.0
  %169 = vmatpush1.msra.mxu0 0.0
  %170 = vmatprep.subr.mxu0 0.0
  %171 = vmatpush1.msra.mxu0 0.0
  %172 = vmatprep.subr.mxu0 0.0
  %173 = vmatpush1.msra.mxu0 0.0
  %174 = vmatprep.subr.mxu0 0.0
  %175 = vmatpush1.msra.mxu0 0.0
  %176 = vmatprep.mubr.f32.mxu0 0.0
  %177 = vmatmul.mubr.f32.gmra.mrb[0].mxu0 %v110
  %v178 = vpop.f32.mrb[0].mxu0
  %v179 = vadd.f32 %v105, %v178
  %v180 = vpop.f32.mrb[0].mxu0
  %181 = vdwg.mxu0
  %v182 = vld [vmem:[%s2] sm:$0xff]
  %v183 = vld [vmem:[%s5] sm:$0xff]
  %v184 = vld [vmem:[%s5 + $0x8] sm:$0xff]
  %v185 = vld [vmem:[%s5 + $0x10] sm:$0xff]
  %vm186 = vcmask 195584
  %v188 = vsel %vm186, %v182, 0
  %190 = vmatprep.subr.mxu0 0.0
  %191 = vmatpush1.msra.mxu0 %v183
  %192 = vmatprep.subr.mxu0 0.0
  %193 = vmatpush1.msra.mxu0 %v184
  %194 = vmatprep.subr.mxu0 0.0
  %195 = vmatpush1.msra.mxu0 %v185
  %196 = vmatprep.subr.mxu0 0.0
  %197 = vmatpush1.msra.mxu0 0.0
  %198 = vmatprep.subr.mxu0 0.0
  %199 = vmatpush1.msra.mxu0 0.0
  %200 = vmatprep.subr.mxu0 0.0
  %201 = vmatpush1.msra.mxu0 0.0
  %202 = vmatprep.subr.mxu0 0.0
  %203 = vmatpush1.msra.mxu0 0.0
  %204 = vmatprep.subr.mxu0 0.0
  %205 = vmatpush1.msra.mxu0 0.0
  %206 = vmatprep.subr.mxu0 0.0
  %207 = vmatpush1.msra.mxu0 0.0
  %208 = vmatprep.subr.mxu0 0.0
  %209 = vmatpush1.msra.mxu0 0.0
  %210 = vmatprep.subr.mxu0 0.0
  %211 = vmatpush1.msra.mxu0 0.0
  %212 = vmatprep.subr.mxu0 0.0
  %213 = vmatpush1.msra.mxu0 0.0
  %214 = vmatprep.subr.mxu0 0.0
  %215 = vmatpush1.msra.mxu0 0.0
  %216 = vmatprep.subr.mxu0 0.0
  %217 = vmatpush1.msra.mxu0 0.0
  %218 = vmatprep.subr.mxu0 0.0
  %219 = vmatpush1.msra.mxu0 0.0
  %220 = vmatprep.subr.mxu0 0.0
  %221 = vmatpush1.msra.mxu0 0.0
  %222 = vmatprep.subr.mxu0 0.0
  %223 = vmatpush1.msra.mxu0 0.0
  %224 = vmatprep.subr.mxu0 0.0
  %225 = vmatpush1.msra.mxu0 0.0
  %226 = vmatprep.subr.mxu0 0.0
  %227 = vmatpush1.msra.mxu0 0.0
  %228 = vmatprep.subr.mxu0 0.0
  %229 = vmatpush1.msra.mxu0 0.0
  %230 = vmatprep.subr.mxu0 0.0
  %231 = vmatpush1.msra.mxu0 0.0
  %232 = vmatprep.subr.mxu0 0.0
  %233 = vmatpush1.msra.mxu0 0.0
  %234 = vmatprep.subr.mxu0 0.0
  %235 = vmatpush1.msra.mxu0 0.0
  %236 = vmatprep.subr.mxu0 0.0
  %237 = vmatpush1.msra.mxu0 0.0
  %238 = vmatprep.subr.mxu0 0.0
  %239 = vmatpush1.msra.mxu0 0.0
  %240 = vmatprep.subr.mxu0 0.0
  %241 = vmatpush1.msra.mxu0 0.0
  %242 = vmatprep.subr.mxu0 0.0
  %243 = vmatpush1.msra.mxu0 0.0
  %244 = vmatprep.subr.mxu0 0.0
  %245 = vmatpush1.msra.mxu0 0.0
  %246 = vmatprep.subr.mxu0 0.0
  %247 = vmatpush1.msra.mxu0 0.0
  %248 = vmatprep.subr.mxu0 0.0
  %249 = vmatpush1.msra.mxu0 0.0
  %250 = vmatprep.subr.mxu0 0.0
  %251 = vmatpush1.msra.mxu0 0.0
  %252 = vmatprep.subr.mxu0 0.0
  %253 = vmatpush1.msra.mxu0 0.0
  %254 = vmatprep.mubr.f32.mxu0 0.0
  %255 = vmatmul.mubr.f32.gmra.mrb[0].mxu0 %v188
  %v256 = vpop.f32.mrb[0].mxu0
  %v257 = vadd.f32 0.0, %v256
  %v258 = vpop.f32.mrb[0].mxu0
  %259 = vdwg.mxu0
  %v260 = vadd.f32 %v179, %v257
  %v261 = vld [vmem:[%s6] sm:$0x1]
  %v263 = vlaneseq
  %v264 = vshrl.u32 %v263, 7
  %v265 = vsub.s32 0, %v264
  %v266 = vrot.slane %v261, %v265
  %v268 = vadd.f32 %v260, %v266
  %vm269 = vcmask 31744
  %270 = vst.msk [vmem:[%s7] sm:$0xff] %vm269, %v268
  // Predicated region
  $region30: #{tpu_custom_call.1} parent=0 // pred_check
    _
  $region31: #{tpu_custom_call.1} parent=0 // pred_check_branch
    %272 = sbr.rel (0) target = $region33
  $region32: #{tpu_custom_call.1} parent=0 // pred_region
    _
  $region33: #{tpu_custom_call.1} parent=0 // pred_fallthru
    _
  // Predicated region
  $region34: #{tpu_custom_call.1} parent=0 // pred_check
    _
  $region35: #{tpu_custom_call.1} parent=0 // pred_check_branch
    %274 = sbr.rel (0) target = $region37
  $region36: #{tpu_custom_call.1} parent=0 // pred_region
    _
  $region37: #{tpu_custom_call.1} parent=0 // pred_fallthru
    _

</llo_original>
